<compile_context>
chip_gen: v6e
topology: v6e:2x2x1
jax: 0.10.0
libtpu: 0.0.40
codegen_flags: <defaults>
</compile_context>

<pallas_src>
import jax
import jax.numpy as jnp
from jax.experimental import pallas as pl
from jax.experimental.pallas import tpu as pltpu


def _softq_kernel(xa_ref, w1t_ref, b1_ref, w2t_ref, b2_ref, w3_ref, b3_ref,
                  out_ref):
    # Layer 1: (H, K_pad) @ (K_pad, TB) -> (H, TB). Single merged matmul over
    # the packed [x | a | pad] slab. bf16 operands, f32 accumulation.
    h1 = jnp.dot(w1t_ref[...], xa_ref[...], preferred_element_type=jnp.float32)
    h1 = jnp.maximum(h1 + b1_ref[...], 0.0)              # f32 bias + ReLU (VPU)

    # Layer 2: (H, H) @ (H, TB) -> (H, TB). bf16 operands, f32 accumulation.
    h2 = jnp.dot(w2t_ref[...], h1.astype(jnp.bfloat16),
                 preferred_element_type=jnp.float32)
    h2 = jnp.maximum(h2 + b2_ref[...], 0.0)              # f32 bias + ReLU (VPU)

    # Layer 3: VPU multiply by the fc3 weight column + cross-sublane reduce.
    # Result is already a lane-dense (1, TB) row -> packed, minimal writeback.
    q = jnp.sum(h2 * w3_ref[...], axis=0, keepdims=True) + b3_ref[0]
    out_ref[...] = q.astype(out_ref.dtype)


def _pick_batch_tile(batch, block_b):
    if batch <= 128:
        return batch            # full-array block (allowed for small batches)
    # >= 2 grid steps when possible (v7x: 2 TensorCores split the "parallel"
    # axis); TB a multiple of 128 (v5e MXU alignment), capped at block_b
    # (default 512 amortizes per-step overhead / W2 re-push on v5e/v6e).
    half = -(-batch // 2)
    half_aligned = ((half + 127) // 128) * 128
    return max(128, min(block_b, half_aligned))


def soft_q_forward(x, a, params, block_b=512):
    """x: (B, obs_dim) f32, a: (B, act_dim) f32  ->  q: (B, 1) f32."""
    w1t, b1, w2t, b2, w3, b3 = params
    B = x.shape[0]
    H, k_pad = w1t.shape
    d_in = x.shape[1] + a.shape[1]

    # Pack [x | a | zero-pad]^T into a (k_pad, B) bf16 slab (tiny, done once).
    xa = jnp.concatenate([x, a], axis=1).astype(jnp.bfloat16)
    xa_t = jnp.zeros((k_pad, B), jnp.bfloat16).at[:d_in, :].set(xa.T)

    TB = _pick_batch_tile(B, block_b)
    grid = (pl.cdiv(B, TB),)

    const2d = lambda shape: pl.BlockSpec(shape, lambda i: (0, 0))

    out = pl.pallas_call(
        _softq_kernel,
        out_shape=jax.ShapeDtypeStruct((1, B), jnp.float32),
        grid=grid,
        in_specs=[
            pl.BlockSpec((k_pad, TB), lambda i: (0, i)),        # [x|a|pad]^T bf16
            const2d((H, k_pad)),                                # W1^T (bf16)
            const2d((H, 1)),                                    # b1   (f32)
            const2d((H, H)),                                    # W2^T (bf16)
            const2d((H, 1)),                                    # b2   (f32)
            const2d((H, 1)),                                    # fc3 weight column (f32)
            pl.BlockSpec(memory_space=pltpu.MemorySpace.SMEM),  # b3 scalar
        ],
        out_specs=pl.BlockSpec((1, TB), lambda i: (0, i)),
        compiler_params=pltpu.CompilerParams(
            dimension_semantics=("parallel",),
        ),
    )(xa_t, w1t, b1, w2t, b2, w3, b3)

    # (1, B) row -> (B, 1) column; trailing partial blocks were clipped by
    # Pallas so no padded garbage ever reaches HBM.
    return out.reshape(B, 1)


def init_params(key, obs_dim, act_dim, hidden=256):
    """nn.Linear-style uniform(-1/sqrt(fan_in), 1/sqrt(fan_in)) init.

    Weights are stored transposed (feature-major) for the kernel; W1^T is
    zero-padded to (hidden, K_pad), K_pad = round_up(obs_dim+act_dim, 16).
    MXU operands (W1, W2) are bf16; biases and the fc3 weight stay f32.
    """
    d_in = obs_dim + act_dim
    k_pad = max(16, -(-d_in // 16) * 16)
    keys = jax.random.split(key, 6)

    def unif(k, shape, fan_in):
        bound = 1.0 / jnp.sqrt(float(fan_in))
        return jax.random.uniform(k, shape, jnp.float32, -bound, bound)

    w1 = unif(keys[0], (d_in, hidden), d_in)                   # fc1.weight^T
    w1t = jnp.zeros((hidden, k_pad), jnp.float32).at[:, :d_in].set(w1.T)
    w1t = w1t.astype(jnp.bfloat16)
    b1 = unif(keys[1], (hidden, 1), d_in)
    w2t = unif(keys[2], (hidden, hidden), hidden).T.astype(jnp.bfloat16)
    b2 = unif(keys[3], (hidden, 1), hidden)
    w3 = unif(keys[4], (hidden, 1), hidden)                    # fc3 weight column
    b3 = unif(keys[5], (1,), hidden)                           # fc3 bias scalar
    return (w1t, b1, w2t, b2, w3, b3)


def reference_forward(x, a, params):
    """Pure-JAX reference mirroring the kernel's dtype choices."""
    w1t, b1, w2t, b2, w3, b3 = params
    d_in = x.shape[1] + a.shape[1]
    xa = jnp.concatenate([x, a], axis=1).astype(jnp.bfloat16)
    h1 = jnp.dot(xa, w1t[:, :d_in].T, preferred_element_type=jnp.float32)
    h1 = jnp.maximum(h1 + b1[:, 0], 0.0)
    h2 = jnp.dot(h1.astype(jnp.bfloat16), w2t.T, preferred_element_type=jnp.float32)
    h2 = jnp.maximum(h2 + b2[:, 0], 0.0)
    return jnp.sum(h2 * w3[:, 0], axis=-1, keepdims=True) + b3[0]


if __name__ == "__main__":
    key = jax.random.PRNGKey(0)
    k_x, k_a, k_p, k_x2, k_a2 = jax.random.split(key, 5)

    obs_dim, act_dim, hidden = 8, 4, 256
    params = init_params(k_p, obs_dim, act_dim, hidden=hidden)

    # Small batch (typical env step): single grid step, full-array blocks.
    batch = 2
    x = jax.random.normal(k_x, (batch, obs_dim), jnp.float32)
    a = jax.random.normal(k_a, (batch, act_dim), jnp.float32)
    q = soft_q_forward(x, a, params)
    jax.block_until_ready(q)
    q_ref = reference_forward(x, a, params)
    assert q.shape == (batch, 1)
    assert jnp.allclose(q, q_ref, atol=2e-3, rtol=2e-3), (q, q_ref)

    # Larger batch: exercises the multi-step grid and a partial trailing block.
    batch2 = 384
    x2 = jax.random.normal(k_x2, (batch2, obs_dim), jnp.float32)
    a2 = jax.random.normal(k_a2, (batch2, act_dim), jnp.float32)
    q2 = soft_q_forward(x2, a2, params)
    jax.block_until_ready(q2)
    q2_ref = reference_forward(x2, a2, params)
    assert q2.shape == (batch2, 1)
    assert jnp.allclose(q2, q2_ref, atol=2e-3, rtol=2e-3)

    print("KERNEL_OK")
</pallas_src>

<mosaic_0001>
module attributes {stable_mosaic.version = 11 : i64} {
  func.func @_softq_kernel(%arg0: i32, %arg1: memref<16x2xbf16, #tpu.memory_space<vmem>>, %arg2: memref<256x16xbf16, #tpu.memory_space<vmem>>, %arg3: memref<256x1xf32, #tpu.memory_space<vmem>>, %arg4: memref<256x256xbf16, #tpu.memory_space<vmem>>, %arg5: memref<256x1xf32, #tpu.memory_space<vmem>>, %arg6: memref<256x1xf32, #tpu.memory_space<vmem>>, %arg7: memref<1xf32, #tpu.memory_space<smem>>, %arg8: memref<1x2xf32, #tpu.memory_space<vmem>>) attributes {dimension_semantics = [#tpu.dimension_semantics<parallel>], iteration_bounds = array<i64: 1>, scalar_prefetch = 0 : i64, scratch_operands = 0 : i64, tpu.core_type = #tpu.core_type<tc>, window_params = [{transform_indices = @transform_0, window_bounds = array<i64: 16, 2>}, {pipeline_mode = #tpu.pipeline_mode<synchronous>, transform_indices = @transform_1, window_bounds = array<i64: 256, 16>}, {pipeline_mode = #tpu.pipeline_mode<synchronous>, transform_indices = @transform_2, window_bounds = array<i64: 256, 1>}, {pipeline_mode = #tpu.pipeline_mode<synchronous>, transform_indices = @transform_3, window_bounds = array<i64: 256, 256>}, {pipeline_mode = #tpu.pipeline_mode<synchronous>, transform_indices = @transform_4, window_bounds = array<i64: 256, 1>}, {pipeline_mode = #tpu.pipeline_mode<synchronous>, transform_indices = @transform_5, window_bounds = array<i64: 256, 1>}, {transform_indices = @transform_6, window_bounds = array<i64: 1>}, {transform_indices = @transform_7, window_bounds = array<i64: 1, 2>}]} {
    %c0 = arith.constant 0 : index
    %c0_0 = arith.constant 0 : index
    %0 = vector.load %arg2[%c0, %c0_0] : memref<256x16xbf16, #tpu.memory_space<vmem>>, vector<256x16xbf16>
    %c0_1 = arith.constant 0 : index
    %c0_2 = arith.constant 0 : index
    %1 = vector.load %arg1[%c0_1, %c0_2] : memref<16x2xbf16, #tpu.memory_space<vmem>>, vector<16x2xbf16>
    %cst = arith.constant dense<0.000000e+00> : vector<256x2xf32>
    %2 = tpu.matmul %0, %1, %cst {dimension_numbers = #tpu.dot_dimension_numbers<[1], [0], [0], [1], [0, 0, 1, 1], [], []>} : vector<256x16xbf16>, vector<16x2xbf16>, vector<256x2xf32> -> vector<256x2xf32>
    %c0_3 = arith.constant 0 : index
    %c0_4 = arith.constant 0 : index
    %3 = vector.load %arg3[%c0_3, %c0_4] : memref<256x1xf32, #tpu.memory_space<vmem>>, vector<256x1xf32>
    %4 = vector.broadcast %3 : vector<256x1xf32> to vector<256x2xf32>
    %5 = arith.addf %2, %4 : vector<256x2xf32>
    %cst_5 = arith.constant 0.000000e+00 : f32
    %6 = vector.broadcast %cst_5 : f32 to vector<256x2xf32>
    %7 = arith.maximumf %5, %6 : vector<256x2xf32>
    %c0_6 = arith.constant 0 : index
    %c0_7 = arith.constant 0 : index
    %8 = vector.load %arg4[%c0_6, %c0_7] : memref<256x256xbf16, #tpu.memory_space<vmem>>, vector<256x256xbf16>
    %9 = arith.truncf %7 : vector<256x2xf32> to vector<256x2xbf16>
    %cst_8 = arith.constant dense<0.000000e+00> : vector<256x2xf32>
    %10 = tpu.matmul %8, %9, %cst_8 {dimension_numbers = #tpu.dot_dimension_numbers<[1], [0], [0], [1], [0, 0, 1, 1], [], []>} : vector<256x256xbf16>, vector<256x2xbf16>, vector<256x2xf32> -> vector<256x2xf32>
    %c0_9 = arith.constant 0 : index
    %c0_10 = arith.constant 0 : index
    %11 = vector.load %arg5[%c0_9, %c0_10] : memref<256x1xf32, #tpu.memory_space<vmem>>, vector<256x1xf32>
    %12 = vector.broadcast %11 : vector<256x1xf32> to vector<256x2xf32>
    %13 = arith.addf %10, %12 : vector<256x2xf32>
    %cst_11 = arith.constant 0.000000e+00 : f32
    %14 = vector.broadcast %cst_11 : f32 to vector<256x2xf32>
    %15 = arith.maximumf %13, %14 : vector<256x2xf32>
    %c0_12 = arith.constant 0 : index
    %c0_13 = arith.constant 0 : index
    %16 = vector.load %arg6[%c0_12, %c0_13] : memref<256x1xf32, #tpu.memory_space<vmem>>, vector<256x1xf32>
    %17 = vector.broadcast %16 : vector<256x1xf32> to vector<256x2xf32>
    %18 = arith.mulf %15, %17 : vector<256x2xf32>
    %cst_14 = arith.constant dense<0.000000e+00> : vector<2xf32>
    %19 = vector.multi_reduction <add>, %18, %cst_14 [0] : vector<256x2xf32> to vector<2xf32>
    %20 = vector.shape_cast %19 : vector<2xf32> to vector<1x2xf32>
    %c0_15 = arith.constant 0 : index
    %21 = memref.load %arg7[%c0_15] : memref<1xf32, #tpu.memory_space<smem>>
    %22 = vector.broadcast %21 : f32 to vector<1x2xf32>
    %23 = arith.addf %20, %22 : vector<1x2xf32>
    %c0_16 = arith.constant 0 : index
    %c0_17 = arith.constant 0 : index
    %24 = vector.load %arg8[%c0_16, %c0_17] : memref<1x2xf32, #tpu.memory_space<vmem>>, vector<1x2xf32>
    tpu.vector_store %arg8[%c0_16, %c0_17], %23 {strides = array<i32>} : memref<1x2xf32, #tpu.memory_space<vmem>>, vector<1x2xf32>,
    return
  }
  func.func @transform_0(%arg0: i32) -> (i32, i32) {
    %c0_i32 = arith.constant 0 : i32
    %c0_i32_0 = arith.constant 0 : i32
    return %c0_i32, %arg0 : i32, i32
  }
  func.func @transform_1(%arg0: i32) -> (i32, i32) {
    %c0_i32 = arith.constant 0 : i32
    %c0_i32_0 = arith.constant 0 : i32
    %c0_i32_1 = arith.constant 0 : i32
    return %c0_i32, %c0_i32_0 : i32, i32
  }
  func.func @transform_2(%arg0: i32) -> (i32, i32) {
    %c0_i32 = arith.constant 0 : i32
    %c0_i32_0 = arith.constant 0 : i32
    %c0_i32_1 = arith.constant 0 : i32
    return %c0_i32, %c0_i32_0 : i32, i32
  }
  func.func @transform_3(%arg0: i32) -> (i32, i32) {
    %c0_i32 = arith.constant 0 : i32
    %c0_i32_0 = arith.constant 0 : i32
    %c0_i32_1 = arith.constant 0 : i32
    return %c0_i32, %c0_i32_0 : i32, i32
  }
  func.func @transform_4(%arg0: i32) -> (i32, i32) {
    %c0_i32 = arith.constant 0 : i32
    %c0_i32_0 = arith.constant 0 : i32
    %c0_i32_1 = arith.constant 0 : i32
    return %c0_i32, %c0_i32_0 : i32, i32
  }
  func.func @transform_5(%arg0: i32) -> (i32, i32) {
    %c0_i32 = arith.constant 0 : i32
    %c0_i32_0 = arith.constant 0 : i32
    %c0_i32_1 = arith.constant 0 : i32
    return %c0_i32, %c0_i32_0 : i32, i32
  }
  func.func @transform_6(%arg0: i32) -> i32 {
    %c0_i32 = arith.constant 0 : i32
    %c0_i32_0 = arith.constant 0 : i32
    return %c0_i32 : i32
  }
  func.func @transform_7(%arg0: i32) -> (i32, i32) {
    %c0_i32 = arith.constant 0 : i32
    %c0_i32_0 = arith.constant 0 : i32
    return %c0_i32, %arg0 : i32, i32
  }
}

</mosaic_0001>

<llo_original>
// kernel: tpu_custom_call.1
$region0: #{tpu_custom_call.1}
  #allocation0 [shape = 'u32[]', space=smem, size = 0x4, offset = 0x4, fixed_abs, tag = 'smem constant byte address 0x4 - core index']
  #allocation1 [shape = 'u32[144,128]{1,0:T(1,128)}', space=vmem, size = 0x12000, scoped, tag = 'internal scratch']
  #allocation2 [shape = 'f32[1]{0:T(128)S(6)}', space=smem, size = 0x200, scoped, tag = 'scoped memory for tpu_custom_call.1']
  %s0 = inlined_call_operand.vmem [shape: bf16[16,2], index: 0, kind: input, shape index: {}]
  %s1 = inlined_call_operand.vmem [shape: bf16[256,16], index: 1, kind: input, shape index: {}]
  %s2 = inlined_call_operand.vmem [shape: f32[256,1], index: 2, kind: input, shape index: {}]
  %s3 = inlined_call_operand.vmem [shape: bf16[256,256], index: 3, kind: input, shape index: {}]
  %s4 = inlined_call_operand.vmem [shape: f32[256,1], index: 4, kind: input, shape index: {}]
  %s5 = inlined_call_operand.vmem [shape: f32[256,1], index: 5, kind: input, shape index: {}]
  %s6 = inlined_call_operand.<no memory space> [shape: f32[1], index: 6, kind: input, shape index: {}]
  %s7 = inlined_call_operand.hbm [shape: f32[1,2], index: 7, kind: output, shape index: {}]
  %s8 = sld [smem:[#allocation0]]
  $region38: #{tpu_custom_call.1} parent=0
    _
  %s10 = ssub.s32 1, %s8
  %s11 = scalar_select 0, %s10, %s8
  %12 = sst [smem:[#allocation2]] %s6
  $region1: #{tpu_custom_call.1} parent=0
    #allocation3 [shape = 'u8[512]{0}', space=vmem, size = 0x400, scoped, tag = 'output window, operand 0, single buffered']
    #allocation4 [shape = 's32[1]{0}', space=sflag, size = 0x4, scoped, tag = 'scoped memory for tpu_custom_call.1']
    %13 = vsyncpa [#allocation4], 0
    // Predicated region
    $region2: #{tpu_custom_call.1} parent=1 // pred_check
      _
    $region3: #{tpu_custom_call.1} parent=1 // pred_check_branch
      %15 = sbr.rel (0) target = $region5
    $region4: #{tpu_custom_call.1} parent=1 // pred_region
      _
    $region5: #{tpu_custom_call.1} parent=1 // pred_fallthru
      _
    // Predicated region
    $region6: #{tpu_custom_call.1} parent=1 // pred_check
      _
    $region7: #{tpu_custom_call.1} parent=1 // pred_check_branch
      %17 = sbr.rel (0) target = $region9
    $region8: #{tpu_custom_call.1} parent=1 // pred_region
      _
    $region9: #{tpu_custom_call.1} parent=1 // pred_fallthru
      _
    // Predicated region
    $region10: #{tpu_custom_call.1} parent=1 // pred_check
      _
    $region11: #{tpu_custom_call.1} parent=1 // pred_check_branch
      %19 = sbr.rel (0) target = $region13
    $region12: #{tpu_custom_call.1} parent=1 // pred_region
      _
    $region13: #{tpu_custom_call.1} parent=1 // pred_fallthru
      _
    // Predicated region
    $region14: #{tpu_custom_call.1} parent=1 // pred_check
      _
    $region15: #{tpu_custom_call.1} parent=1 // pred_check_branch
      %21 = sbr.rel (0) target = $region17
    $region16: #{tpu_custom_call.1} parent=1 // pred_region
      _
    $region17: #{tpu_custom_call.1} parent=1 // pred_fallthru
      _
    // Predicated region
    $region18: #{tpu_custom_call.1} parent=1 // pred_check
      _
    $region19: #{tpu_custom_call.1} parent=1 // pred_check_branch
      %23 = sbr.rel (0) target = $region21
    $region20: #{tpu_custom_call.1} parent=1 // pred_region
      _
    $region21: #{tpu_custom_call.1} parent=1 // pred_fallthru
      _
    // Predicated region
    $region22: #{tpu_custom_call.1} parent=1 // pred_check
      _
    $region23: #{tpu_custom_call.1} parent=1 // pred_check_branch
      %25 = sbr.rel (0) target = $region25
    $region24: #{tpu_custom_call.1} parent=1 // pred_region
      _
    $region25: #{tpu_custom_call.1} parent=1 // pred_fallthru
      _
    // Predicated region
    $region26: #{tpu_custom_call.1} parent=1 // pred_check
      _
    $region27: #{tpu_custom_call.1} parent=1 // pred_check_branch
      %27 = sbr.rel (0) target = $region29
    $region28: #{tpu_custom_call.1} parent=1 // pred_region
      _
    $region29: #{tpu_custom_call.1} parent=1 // pred_fallthru
      _
    %v29 = vld [vmem:[%s1] sm:$0xf]
    %v30 = vld [vmem:[%s1 + $0x4] sm:$0xf]
    %v31 = vld [vmem:[%s1 + $0x8] sm:$0xf]
    %v32 = vld [vmem:[%s1 + $0xc] sm:$0xf]
    %v33 = vld [vmem:[%s1 + $0x10] sm:$0xf]
    %v34 = vld [vmem:[%s1 + $0x14] sm:$0xf]
    %v35 = vld [vmem:[%s1 + $0x18] sm:$0xf]
    %v36 = vld [vmem:[%s1 + $0x1c] sm:$0xf]
    %v37 = vld [vmem:[%s1 + $0x20] sm:$0xf]
    %v38 = vld [vmem:[%s1 + $0x24] sm:$0xf]
    %v39 = vld [vmem:[%s1 + $0x28] sm:$0xf]
    %v40 = vld [vmem:[%s1 + $0x2c] sm:$0xf]
    %v41 = vld [vmem:[%s1 + $0x30] sm:$0xf]
    %v42 = vld [vmem:[%s1 + $0x34] sm:$0xf]
    %v43 = vld [vmem:[%s1 + $0x38] sm:$0xf]
    %v44 = vld [vmem:[%s1 + $0x3c] sm:$0xf]
    %v45 = vld [vmem:[%s1 + $0x40] sm:$0xf]
    %v46 = vld [vmem:[%s1 + $0x44] sm:$0xf]
    %v47 = vld [vmem:[%s1 + $0x48] sm:$0xf]
    %v48 = vld [vmem:[%s1 + $0x4c] sm:$0xf]
    %v49 = vld [vmem:[%s1 + $0x50] sm:$0xf]
    %v50 = vld [vmem:[%s1 + $0x54] sm:$0xf]
    %v51 = vld [vmem:[%s1 + $0x58] sm:$0xf]
    %v52 = vld [vmem:[%s1 + $0x5c] sm:$0xf]
    %v53 = vld [vmem:[%s1 + $0x60] sm:$0xf]
    %v54 = vld [vmem:[%s1 + $0x64] sm:$0xf]
    %v55 = vld [vmem:[%s1 + $0x68] sm:$0xf]
    %v56 = vld [vmem:[%s1 + $0x6c] sm:$0xf]
    %v57 = vld [vmem:[%s1 + $0x70] sm:$0xf]
    %v58 = vld [vmem:[%s1 + $0x74] sm:$0xf]
    %v59 = vld [vmem:[%s1 + $0x78] sm:$0xf]
    %v60 = vld [vmem:[%s1 + $0x7c] sm:$0xf]
    %v61 = vld [vmem:[%s0] sm:$0xf]
    %v62 = vld [vmem:[%s0 + $0x4] sm:$0xf]
    %v63 = vld [vmem:[%s2] sm:$0xff]
    %v64 = vld [vmem:[%s2 + $0x8] sm:$0xff]
    %v65 = vld [vmem:[%s2 + $0x10] sm:$0xff]
    %v66 = vld [vmem:[%s2 + $0x18] sm:$0xff]
    %v67 = vld [vmem:[%s2 + $0x20] sm:$0xff]
    %v68 = vld [vmem:[%s2 + $0x28] sm:$0xff]
    %v69 = vld [vmem:[%s2 + $0x30] sm:$0xff]
    %v70 = vld [vmem:[%s2 + $0x38] sm:$0xff]
    %v71 = vld [vmem:[%s2 + $0x40] sm:$0xff]
    %v72 = vld [vmem:[%s2 + $0x48] sm:$0xff]
    %v73 = vld [vmem:[%s2 + $0x50] sm:$0xff]
    %v74 = vld [vmem:[%s2 + $0x58] sm:$0xff]
    %v75 = vld [vmem:[%s2 + $0x60] sm:$0xff]
    %v76 = vld [vmem:[%s2 + $0x68] sm:$0xff]
    %v77 = vld [vmem:[%s2 + $0x70] sm:$0xff]
    %v78 = vld [vmem:[%s2 + $0x78] sm:$0xff]
    %v79 = vld [vmem:[%s2 + $0x80] sm:$0xff]
    %v80 = vld [vmem:[%s2 + $0x88] sm:$0xff]
    %v81 = vld [vmem:[%s2 + $0x90] sm:$0xff]
    %v82 = vld [vmem:[%s2 + $0x98] sm:$0xff]
    %v83 = vld [vmem:[%s2 + $0xa0] sm:$0xff]
    %v84 = vld [vmem:[%s2 + $0xa8] sm:$0xff]
    %v85 = vld [vmem:[%s2 + $0xb0] sm:$0xff]
    %v86 = vld [vmem:[%s2 + $0xb8] sm:$0xff]
    %v87 = vld [vmem:[%s2 + $0xc0] sm:$0xff]
    %v88 = vld [vmem:[%s2 + $0xc8] sm:$0xff]
    %v89 = vld [vmem:[%s2 + $0xd0] sm:$0xff]
    %v90 = vld [vmem:[%s2 + $0xd8] sm:$0xff]
    %v91 = vld [vmem:[%s2 + $0xe0] sm:$0xff]
    %v92 = vld [vmem:[%s2 + $0xe8] sm:$0xff]
    %v93 = vld [vmem:[%s2 + $0xf0] sm:$0xff]
    %v94 = vld [vmem:[%s2 + $0xf8] sm:$0xff]
    %96 = vset.pattern.permute.xlu0 0
    %97 = vperm.xlu0 %96, %v63
    %v98 = vpop.permute.xlu0 %97
    %101 = vset.pattern.permute.xlu0 0
    %102 = vperm.xlu0 %101, %v64
    %v103 = vpop.permute.xlu0 %102
    %106 = vset.pattern.permute.xlu0 0
    %107 = vperm.xlu0 %106, %v65
    %v108 = vpop.permute.xlu0 %107
    %111 = vset.pattern.permute.xlu0 0
    %112 = vperm.xlu0 %111, %v66
    %v113 = vpop.permute.xlu0 %112
    %116 = vset.pattern.permute.xlu0 0
    %117 = vperm.xlu0 %116, %v67
    %v118 = vpop.permute.xlu0 %117
    %121 = vset.pattern.permute.xlu0 0
    %122 = vperm.xlu0 %121, %v68
    %v123 = vpop.permute.xlu0 %122
    %126 = vset.pattern.permute.xlu0 0
    %127 = vperm.xlu0 %126, %v69
    %v128 = vpop.permute.xlu0 %127
    %131 = vset.pattern.permute.xlu0 0
    %132 = vperm.xlu0 %131, %v70
    %v133 = vpop.permute.xlu0 %132
    %136 = vset.pattern.permute.xlu0 0
    %137 = vperm.xlu0 %136, %v71
    %v138 = vpop.permute.xlu0 %137
    %141 = vset.pattern.permute.xlu0 0
    %142 = vperm.xlu0 %141, %v72
    %v143 = vpop.permute.xlu0 %142
    %146 = vset.pattern.permute.xlu0 0
    %147 = vperm.xlu0 %146, %v73
    %v148 = vpop.permute.xlu0 %147
    %151 = vset.pattern.permute.xlu0 0
    %152 = vperm.xlu0 %151, %v74
    %v153 = vpop.permute.xlu0 %152
    %156 = vset.pattern.permute.xlu0 0
    %157 = vperm.xlu0 %156, %v75
    %v158 = vpop.permute.xlu0 %157
    %161 = vset.pattern.permute.xlu0 0
    %162 = vperm.xlu0 %161, %v76
    %v163 = vpop.permute.xlu0 %162
    %166 = vset.pattern.permute.xlu0 0
    %167 = vperm.xlu0 %166, %v77
    %v168 = vpop.permute.xlu0 %167
    %171 = vset.pattern.permute.xlu0 0
    %172 = vperm.xlu0 %171, %v78
    %v173 = vpop.permute.xlu0 %172
    %176 = vset.pattern.permute.xlu0 0
    %177 = vperm.xlu0 %176, %v79
    %v178 = vpop.permute.xlu0 %177
    %181 = vset.pattern.permute.xlu0 0
    %182 = vperm.xlu0 %181, %v80
    %v183 = vpop.permute.xlu0 %182
    %186 = vset.pattern.permute.xlu0 0
    %187 = vperm.xlu0 %186, %v81
    %v188 = vpop.permute.xlu0 %187
    %191 = vset.pattern.permute.xlu0 0
    %192 = vperm.xlu0 %191, %v82
    %v193 = vpop.permute.xlu0 %192
    %196 = vset.pattern.permute.xlu0 0
    %197 = vperm.xlu0 %196, %v83
    %v198 = vpop.permute.xlu0 %197
    %201 = vset.pattern.permute.xlu0 0
    %202 = vperm.xlu0 %201, %v84
    %v203 = vpop.permute.xlu0 %202
    %206 = vset.pattern.permute.xlu0 0
    %207 = vperm.xlu0 %206, %v85
    %v208 = vpop.permute.xlu0 %207
    %211 = vset.pattern.permute.xlu0 0
    %212 = vperm.xlu0 %211, %v86
    %v213 = vpop.permute.xlu0 %212
    %216 = vset.pattern.permute.xlu0 0
    %217 = vperm.xlu0 %216, %v87
    %v218 = vpop.permute.xlu0 %217
    %221 = vset.pattern.permute.xlu0 0
    %222 = vperm.xlu0 %221, %v88
    %v223 = vpop.permute.xlu0 %222
    %226 = vset.pattern.permute.xlu0 0
    %227 = vperm.xlu0 %226, %v89
    %v228 = vpop.permute.xlu0 %227
    %231 = vset.pattern.permute.xlu0 0
    %232 = vperm.xlu0 %231, %v90
    %v233 = vpop.permute.xlu0 %232
    %236 = vset.pattern.permute.xlu0 0
    %237 = vperm.xlu0 %236, %v91
    %v238 = vpop.permute.xlu0 %237
    %241 = vset.pattern.permute.xlu0 0
    %242 = vperm.xlu0 %241, %v92
    %v243 = vpop.permute.xlu0 %242
    %246 = vset.pattern.permute.xlu0 0
    %247 = vperm.xlu0 %246, %v93
    %v248 = vpop.permute.xlu0 %247
    %251 = vset.pattern.permute.xlu0 0
    %252 = vperm.xlu0 %251, %v94
    %v253 = vpop.permute.xlu0 %252
    %v287 = vunpack.c.l.b16 %v29
    %v288 = vunpack.c.l.b16 %v30
    %v289 = vunpack.c.l.b16 %v31
    %v290 = vunpack.c.l.b16 %v32
    %v291 = vunpack.c.l.b16 %v33
    %v292 = vunpack.c.l.b16 %v34
    %v293 = vunpack.c.l.b16 %v35
    %v294 = vunpack.c.l.b16 %v36
    %v295 = vunpack.c.l.b16 %v37
    %v296 = vunpack.c.l.b16 %v38
    %v297 = vunpack.c.l.b16 %v39
    %v298 = vunpack.c.l.b16 %v40
    %v299 = vunpack.c.l.b16 %v41
    %v300 = vunpack.c.l.b16 %v42
    %v301 = vunpack.c.l.b16 %v43
    %v302 = vunpack.c.l.b16 %v44
    %v303 = vunpack.c.l.b16 %v45
    %v304 = vunpack.c.l.b16 %v46
    %v305 = vunpack.c.l.b16 %v47
    %v306 = vunpack.c.l.b16 %v48
    %v307 = vunpack.c.l.b16 %v49
    %v308 = vunpack.c.l.b16 %v50
    %v309 = vunpack.c.l.b16 %v51
    %v310 = vunpack.c.l.b16 %v52
    %v311 = vunpack.c.l.b16 %v53
    %v312 = vunpack.c.l.b16 %v54
    %v313 = vunpack.c.l.b16 %v55
    %v314 = vunpack.c.l.b16 %v56
    %v315 = vunpack.c.l.b16 %v57
    %v316 = vunpack.c.l.b16 %v58
    %v317 = vunpack.c.l.b16 %v59
    %v318 = vunpack.c.l.b16 %v60
    %v319 = vpack.c.b16 %v288, %v287
    %v320 = vpack.c.b16 %v290, %v289
    %v321 = vpack.c.b16 %v292, %v291
    %v322 = vpack.c.b16 %v294, %v293
    %v323 = vpack.c.b16 %v296, %v295
    %v324 = vpack.c.b16 %v298, %v297
    %v325 = vpack.c.b16 %v300, %v299
    %v326 = vpack.c.b16 %v302, %v301
    %v327 = vpack.c.b16 %v304, %v303
    %v328 = vpack.c.b16 %v306, %v305
    %v329 = vpack.c.b16 %v308, %v307
    %v330 = vpack.c.b16 %v310, %v309
    %v331 = vpack.c.b16 %v312, %v311
    %v332 = vpack.c.b16 %v314, %v313
    %v333 = vpack.c.b16 %v316, %v315
    %v334 = vpack.c.b16 %v318, %v317
    %v337 = vunpack.c.l.b16 %v61
    %v338 = vunpack.c.l.b16 %v62
    %v339 = vpack.c.b16 %v338, %v337
    %vm341 = vcmask 130048
    %v343 = vsel %vm341, %v319, 0
    %v346 = vsel %vm341, %v320, 0
    %v349 = vsel %vm341, %v321, 0
    %v352 = vsel %vm341, %v322, 0
    %v355 = vsel %vm341, %v323, 0
    %v358 = vsel %vm341, %v324, 0
    %v361 = vsel %vm341, %v325, 0
    %v364 = vsel %vm341, %v326, 0
    %v367 = vsel %vm341, %v327, 0
    %v370 = vsel %vm341, %v328, 0
    %v373 = vsel %vm341, %v329, 0
    %v376 = vsel %vm341, %v330, 0
    %v379 = vsel %vm341, %v331, 0
    %v382 = vsel %vm341, %v332, 0
    %v385 = vsel %vm341, %v333, 0
    %v388 = vsel %vm341, %v334, 0
    %390 = vmatprep.subr.bf16.mxu0 0
    %391 = vmatpush1.bf16.msra.mxu0 0
    %392 = vmatprep.subr.bf16.mxu0 0
    %393 = vmatpush1.bf16.msra.mxu0 0
    %394 = vmatprep.subr.bf16.mxu0 0
    %395 = vmatpush1.bf16.msra.mxu0 0
    %396 = vmatprep.subr.bf16.mxu0 0
    %397 = vmatpush1.bf16.msra.mxu0 0
    %398 = vmatprep.subr.bf16.mxu0 0
    %399 = vmatpush1.bf16.msra.mxu0 0
    %400 = vmatprep.subr.bf16.mxu0 0
    %401 = vmatpush1.bf16.msra.mxu0 0
    %402 = vmatprep.subr.bf16.mxu0 0
    %403 = vmatpush1.bf16.msra.mxu0 0
    %404 = vmatprep.subr.bf16.mxu0 0
    %405 = vmatpush1.bf16.msra.mxu0 %v339
    %406 = vmatprep.subr.bf16.mxu0 0
    %407 = vmatpush2.bf16.msra.mxu0 0
    %408 = vmatprep.subr.bf16.mxu0 0
    %409 = vmatpush2.bf16.msra.mxu0 0
    %410 = vmatprep.subr.bf16.mxu0 0
    %411 = vmatpush2.bf16.msra.mxu0 0
    %412 = vmatprep.subr.bf16.mxu0 0
    %413 = vmatpush2.bf16.msra.mxu0 0
    %414 = vmatprep.subr.bf16.mxu0 0
    %415 = vmatpush2.bf16.msra.mxu0 0
    %416 = vmatprep.subr.bf16.mxu0 0
    %417 = vmatpush2.bf16.msra.mxu0 0
    %418 = vmatprep.subr.bf16.mxu0 0
    %419 = vmatpush2.bf16.msra.mxu0 0
    %420 = vmatprep.subr.bf16.mxu0 0
    %421 = vmatpush2.bf16.msra.mxu0 0
    %422 = vmatprep.mubr.bf16.mxu0 0
    %423 = vmatmul.mubr.bf16.gmra.mxu0 %v343
    %v424 = vpop.f32.mrf.mxu0
    %v425 = vadd.f32 %v98, %v424
    %v426 = vpop.f32.mrf.mxu0
    %v427 = vpop.f32.mrf.mxu0
    %v428 = vadd.f32 %v103, %v427
    %v429 = vpop.f32.mrf.mxu0
    %430 = vmatprep.mubr.bf16.mxu0 0
    %431 = vmatmul.mubr.bf16.gmra.mxu0 %v346
    %v432 = vpop.f32.mrf.mxu0
    %v433 = vadd.f32 %v108, %v432
    %v434 = vpop.f32.mrf.mxu0
    %v435 = vpop.f32.mrf.mxu0
    %v436 = vadd.f32 %v113, %v435
    %v437 = vpop.f32.mrf.mxu0
    %438 = vmatprep.mubr.bf16.mxu0 0
    %439 = vmatmul.mubr.bf16.gmra.mxu0 %v349
    %v440 = vpop.f32.mrf.mxu0
    %v441 = vadd.f32 %v118, %v440
    %v442 = vpop.f32.mrf.mxu0
    %v443 = vpop.f32.mrf.mxu0
    %v444 = vadd.f32 %v123, %v443
    %v445 = vpop.f32.mrf.mxu0
    %446 = vmatprep.mubr.bf16.mxu0 0
    %447 = vmatmul.mubr.bf16.gmra.mxu0 %v352
    %v448 = vpop.f32.mrf.mxu0
    %v449 = vadd.f32 %v128, %v448
    %v450 = vpop.f32.mrf.mxu0
    %v451 = vpop.f32.mrf.mxu0
    %v452 = vadd.f32 %v133, %v451
    %v453 = vpop.f32.mrf.mxu0
    %454 = vmatprep.mubr.bf16.mxu0 0
    %455 = vmatmul.mubr.bf16.gmra.mxu0 %v355
    %v456 = vpop.f32.mrf.mxu0
    %v457 = vadd.f32 %v138, %v456
    %v458 = vpop.f32.mrf.mxu0
    %v459 = vpop.f32.mrf.mxu0
    %v460 = vadd.f32 %v143, %v459
    %v461 = vpop.f32.mrf.mxu0
    %462 = vmatprep.mubr.bf16.mxu0 0
    %463 = vmatmul.mubr.bf16.gmra.mxu0 %v358
    %v464 = vpop.f32.mrf.mxu0
    %v465 = vadd.f32 %v148, %v464
    %v466 = vpop.f32.mrf.mxu0
    %v467 = vpop.f32.mrf.mxu0
    %v468 = vadd.f32 %v153, %v467
    %v469 = vpop.f32.mrf.mxu0
    %470 = vmatprep.mubr.bf16.mxu0 0
    %471 = vmatmul.mubr.bf16.gmra.mxu0 %v361
    %v472 = vpop.f32.mrf.mxu0
    %v473 = vadd.f32 %v158, %v472
    %v474 = vpop.f32.mrf.mxu0
    %v475 = vpop.f32.mrf.mxu0
    %v476 = vadd.f32 %v163, %v475
    %v477 = vpop.f32.mrf.mxu0
    %478 = vmatprep.mubr.bf16.mxu0 0
    %479 = vmatmul.mubr.bf16.gmra.mxu0 %v364
    %v480 = vpop.f32.mrf.mxu0
    %v481 = vadd.f32 %v168, %v480
    %v482 = vpop.f32.mrf.mxu0
    %v483 = vpop.f32.mrf.mxu0
    %v484 = vadd.f32 %v173, %v483
    %v485 = vpop.f32.mrf.mxu0
    %486 = vmatprep.mubr.bf16.mxu0 0
    %487 = vmatmul.mubr.bf16.gmra.mxu0 %v367
    %v488 = vpop.f32.mrf.mxu0
    %v489 = vadd.f32 %v178, %v488
    %v490 = vpop.f32.mrf.mxu0
    %v491 = vpop.f32.mrf.mxu0
    %v492 = vadd.f32 %v183, %v491
    %v493 = vpop.f32.mrf.mxu0
    %494 = vmatprep.mubr.bf16.mxu0 0
    %495 = vmatmul.mubr.bf16.gmra.mxu0 %v370
    %v496 = vpop.f32.mrf.mxu0
    %v497 = vadd.f32 %v188, %v496
    %v498 = vpop.f32.mrf.mxu0
    %v499 = vpop.f32.mrf.mxu0
    %v500 = vadd.f32 %v193, %v499
    %v501 = vpop.f32.mrf.mxu0
    %502 = vmatprep.mubr.bf16.mxu0 0
    %503 = vmatmul.mubr.bf16.gmra.mxu0 %v373
    %v504 = vpop.f32.mrf.mxu0
    %v505 = vadd.f32 %v198, %v504
    %v506 = vpop.f32.mrf.mxu0
    %v507 = vpop.f32.mrf.mxu0
    %v508 = vadd.f32 %v203, %v507
    %v509 = vpop.f32.mrf.mxu0
    %510 = vmatprep.mubr.bf16.mxu0 0
    %511 = vmatmul.mubr.bf16.gmra.mxu0 %v376
    %v512 = vpop.f32.mrf.mxu0
    %v513 = vadd.f32 %v208, %v512
    %v514 = vpop.f32.mrf.mxu0
    %v515 = vpop.f32.mrf.mxu0
    %v516 = vadd.f32 %v213, %v515
    %v517 = vpop.f32.mrf.mxu0
    %518 = vmatprep.mubr.bf16.mxu0 0
    %519 = vmatmul.mubr.bf16.gmra.mxu0 %v379
    %v520 = vpop.f32.mrf.mxu0
    %v521 = vadd.f32 %v218, %v520
    %v522 = vpop.f32.mrf.mxu0
    %v523 = vpop.f32.mrf.mxu0
    %v524 = vadd.f32 %v223, %v523
    %v525 = vpop.f32.mrf.mxu0
    %526 = vmatprep.mubr.bf16.mxu0 0
    %527 = vmatmul.mubr.bf16.gmra.mxu0 %v382
    %v528 = vpop.f32.mrf.mxu0
    %v529 = vadd.f32 %v228, %v528
    %v530 = vpop.f32.mrf.mxu0
    %v531 = vpop.f32.mrf.mxu0
    %v532 = vadd.f32 %v233, %v531
    %v533 = vpop.f32.mrf.mxu0
    %534 = vmatprep.mubr.bf16.mxu0 0
    %535 = vmatmul.mubr.bf16.gmra.mxu0 %v385
    %v536 = vpop.f32.mrf.mxu0
    %v537 = vadd.f32 %v238, %v536
    %v538 = vpop.f32.mrf.mxu0
    %v539 = vpop.f32.mrf.mxu0
    %v540 = vadd.f32 %v243, %v539
    %v541 = vpop.f32.mrf.mxu0
    %542 = vmatprep.mubr.bf16.mxu0 0
    %543 = vmatmul.mubr.bf16.gmra.mxu0 %v388
    %v544 = vpop.f32.mrf.mxu0
    %v545 = vadd.f32 %v248, %v544
    %v546 = vpop.f32.mrf.mxu0
    %v547 = vpop.f32.mrf.mxu0
    %v548 = vadd.f32 %v253, %v547
    %v549 = vpop.f32.mrf.mxu0
    %550 = vdwg.mxu0
    %v551 = vmax.f32 %v425, 0.0
    %v552 = vmax.f32 %v428, 0.0
    %v553 = vmax.f32 %v433, 0.0
    %v554 = vmax.f32 %v436, 0.0
    %v555 = vmax.f32 %v441, 0.0
    %v556 = vmax.f32 %v444, 0.0
    %v557 = vmax.f32 %v449, 0.0
    %v558 = vmax.f32 %v452, 0.0
    %v559 = vmax.f32 %v457, 0.0
    %v560 = vmax.f32 %v460, 0.0
    %v561 = vmax.f32 %v465, 0.0
    %v562 = vmax.f32 %v468, 0.0
    %v563 = vmax.f32 %v473, 0.0
    %v564 = vmax.f32 %v476, 0.0
    %v565 = vmax.f32 %v481, 0.0
    %v566 = vmax.f32 %v484, 0.0
    %v567 = vmax.f32 %v489, 0.0
    %v568 = vmax.f32 %v492, 0.0
    %v569 = vmax.f32 %v497, 0.0
    %v570 = vmax.f32 %v500, 0.0
    %v571 = vmax.f32 %v505, 0.0
    %v572 = vmax.f32 %v508, 0.0
    %v573 = vmax.f32 %v513, 0.0
    %v574 = vmax.f32 %v516, 0.0
    %v575 = vmax.f32 %v521, 0.0
    %v576 = vmax.f32 %v524, 0.0
    %v577 = vmax.f32 %v529, 0.0
    %v578 = vmax.f32 %v532, 0.0
    %v579 = vmax.f32 %v537, 0.0
    %v580 = vmax.f32 %v540, 0.0
    %v581 = vmax.f32 %v545, 0.0
    %v582 = vmax.f32 %v548, 0.0
    %v583 = vld [vmem:[%s3] sm:$0xff]
    %v584 = vld [vmem:[%s3 + $0x8] sm:$0xff]
    %v585 = vld [vmem:[%s3 + $0x10] sm:$0xff]
    %v586 = vld [vmem:[%s3 + $0x18] sm:$0xff]
    %v587 = vld [vmem:[%s3 + $0x20] sm:$0xff]
    %v588 = vld [vmem:[%s3 + $0x28] sm:$0xff]
    %v589 = vld [vmem:[%s3 + $0x30] sm:$0xff]
    %v590 = vld [vmem:[%s3 + $0x38] sm:$0xff]
    %v591 = vld [vmem:[%s3 + $0x40] sm:$0xff]
    %v592 = vld [vmem:[%s3 + $0x48] sm:$0xff]
    %v593 = vld [vmem:[%s3 + $0x50] sm:$0xff]
    %v594 = vld [vmem:[%s3 + $0x58] sm:$0xff]
    %v595 = vld [vmem:[%s3 + $0x60] sm:$0xff]
    %v596 = vld [vmem:[%s3 + $0x68] sm:$0xff]
    %v597 = vld [vmem:[%s3 + $0x70] sm:$0xff]
    %v598 = vld [vmem:[%s3 + $0x78] sm:$0xff]
    %v599 = vld [vmem:[%s3 + $0x80] sm:$0xff]
    %v600 = vld [vmem:[%s3 + $0x88] sm:$0xff]
    %v601 = vld [vmem:[%s3 + $0x90] sm:$0xff]
    %v602 = vld [vmem:[%s3 + $0x98] sm:$0xff]
    %v603 = vld [vmem:[%s3 + $0xa0] sm:$0xff]
    %v604 = vld [vmem:[%s3 + $0xa8] sm:$0xff]
    %v605 = vld [vmem:[%s3 + $0xb0] sm:$0xff]
    %v606 = vld [vmem:[%s3 + $0xb8] sm:$0xff]
    %v607 = vld [vmem:[%s3 + $0xc0] sm:$0xff]
    %v608 = vld [vmem:[%s3 + $0xc8] sm:$0xff]
    %v609 = vld [vmem:[%s3 + $0xd0] sm:$0xff]
    %v610 = vld [vmem:[%s3 + $0xd8] sm:$0xff]
    %v611 = vld [vmem:[%s3 + $0xe0] sm:$0xff]
    %v612 = vld [vmem:[%s3 + $0xe8] sm:$0xff]
    %v613 = vld [vmem:[%s3 + $0xf0] sm:$0xff]
    %v614 = vld [vmem:[%s3 + $0xf8] sm:$0xff]
    %v615 = vpack.c.bf16 %v552, %v551
    %v616 = vpack.c.bf16 %v554, %v553
    %v617 = vpack.c.bf16 %v556, %v555
    %v618 = vpack.c.bf16 %v558, %v557
    %v619 = vpack.c.bf16 %v560, %v559
    %v620 = vpack.c.bf16 %v562, %v561
    %v621 = vpack.c.bf16 %v564, %v563
    %v622 = vpack.c.bf16 %v566, %v565
    %v623 = vpack.c.bf16 %v568, %v567
    %v624 = vpack.c.bf16 %v570, %v569
    %v625 = vpack.c.bf16 %v572, %v571
    %v626 = vpack.c.bf16 %v574, %v573
    %v627 = vpack.c.bf16 %v576, %v575
    %v628 = vpack.c.bf16 %v578, %v577
    %v629 = vpack.c.bf16 %v580, %v579
    %v630 = vpack.c.bf16 %v582, %v581
    %v631 = vld [vmem:[%s4] sm:$0xff]
    %v632 = vld [vmem:[%s4 + $0x8] sm:$0xff]
    %v633 = vld [vmem:[%s4 + $0x10] sm:$0xff]
    %v634 = vld [vmem:[%s4 + $0x18] sm:$0xff]
    %v635 = vld [vmem:[%s4 + $0x20] sm:$0xff]
    %v636 = vld [vmem:[%s4 + $0x28] sm:$0xff]
    %v637 = vld [vmem:[%s4 + $0x30] sm:$0xff]
    %v638 = vld [vmem:[%s4 + $0x38] sm:$0xff]
    %v639 = vld [vmem:[%s4 + $0x40] sm:$0xff]
    %v640 = vld [vmem:[%s4 + $0x48] sm:$0xff]
    %v641 = vld [vmem:[%s4 + $0x50] sm:$0xff]
    %v642 = vld [vmem:[%s4 + $0x58] sm:$0xff]
    %v643 = vld [vmem:[%s4 + $0x60] sm:$0xff]
    %v644 = vld [vmem:[%s4 + $0x68] sm:$0xff]
    %v645 = vld [vmem:[%s4 + $0x70] sm:$0xff]
    %v646 = vld [vmem:[%s4 + $0x78] sm:$0xff]
    %v647 = vld [vmem:[%s4 + $0x80] sm:$0xff]
    %v648 = vld [vmem:[%s4 + $0x88] sm:$0xff]
    %v649 = vld [vmem:[%s4 + $0x90] sm:$0xff]
    %v650 = vld [vmem:[%s4 + $0x98] sm:$0xff]
    %v651 = vld [vmem:[%s4 + $0xa0] sm:$0xff]
    %v652 = vld [vmem:[%s4 + $0xa8] sm:$0xff]
    %v653 = vld [vmem:[%s4 + $0xb0] sm:$0xff]
    %v654 = vld [vmem:[%s4 + $0xb8] sm:$0xff]
    %v655 = vld [vmem:[%s4 + $0xc0] sm:$0xff]
    %v656 = vld [vmem:[%s4 + $0xc8] sm:$0xff]
    %v657 = vld [vmem:[%s4 + $0xd0] sm:$0xff]
    %v658 = vld [vmem:[%s4 + $0xd8] sm:$0xff]
    %v659 = vld [vmem:[%s4 + $0xe0] sm:$0xff]
    %v660 = vld [vmem:[%s4 + $0xe8] sm:$0xff]
    %v661 = vld [vmem:[%s4 + $0xf0] sm:$0xff]
    %v662 = vld [vmem:[%s4 + $0xf8] sm:$0xff]
    %664 = vset.pattern.permute.xlu0 0
    %665 = vperm.xlu0 %664, %v631
    %v666 = vpop.permute.xlu0 %665
    %669 = vset.pattern.permute.xlu0 0
    %670 = vperm.xlu0 %669, %v632
    %v671 = vpop.permute.xlu0 %670
    %674 = vset.pattern.permute.xlu0 0
    %675 = vperm.xlu0 %674, %v633
    %v676 = vpop.permute.xlu0 %675
    %679 = vset.pattern.permute.xlu0 0
    %680 = vperm.xlu0 %679, %v634
    %v681 = vpop.permute.xlu0 %680
    %684 = vset.pattern.permute.xlu0 0
    %685 = vperm.xlu0 %684, %v635
    %v686 = vpop.permute.xlu0 %685
    %689 = vset.pattern.permute.xlu0 0
    %690 = vperm.xlu0 %689, %v636
    %v691 = vpop.permute.xlu0 %690
    %694 = vset.pattern.permute.xlu0 0
    %695 = vperm.xlu0 %694, %v637
    %v696 = vpop.permute.xlu0 %695
    %699 = vset.pattern.permute.xlu0 0
    %700 = vperm.xlu0 %699, %v638
    %v701 = vpop.permute.xlu0 %700
    %704 = vset.pattern.permute.xlu0 0
    %705 = vperm.xlu0 %704, %v639
    %v706 = vpop.permute.xlu0 %705
    %709 = vset.pattern.permute.xlu0 0
    %710 = vperm.xlu0 %709, %v640
    %v711 = vpop.permute.xlu0 %710
    %714 = vset.pattern.permute.xlu0 0
    %715 = vperm.xlu0 %714, %v641
    %v716 = vpop.permute.xlu0 %715
    %719 = vset.pattern.permute.xlu0 0
    %720 = vperm.xlu0 %719, %v642
    %v721 = vpop.permute.xlu0 %720
    %724 = vset.pattern.permute.xlu0 0
    %725 = vperm.xlu0 %724, %v643
    %v726 = vpop.permute.xlu0 %725
    %729 = vset.pattern.permute.xlu0 0
    %730 = vperm.xlu0 %729, %v644
    %v731 = vpop.permute.xlu0 %730
    %734 = vset.pattern.permute.xlu0 0
    %735 = vperm.xlu0 %734, %v645
    %v736 = vpop.permute.xlu0 %735
    %739 = vset.pattern.permute.xlu0 0
    %740 = vperm.xlu0 %739, %v646
    %v741 = vpop.permute.xlu0 %740
    %744 = vset.pattern.permute.xlu0 0
    %745 = vperm.xlu0 %744, %v647
    %v746 = vpop.permute.xlu0 %745
    %749 = vset.pattern.permute.xlu0 0
    %750 = vperm.xlu0 %749, %v648
    %v751 = vpop.permute.xlu0 %750
    %754 = vset.pattern.permute.xlu0 0
    %755 = vperm.xlu0 %754, %v649
    %v756 = vpop.permute.xlu0 %755
    %759 = vset.pattern.permute.xlu0 0
    %760 = vperm.xlu0 %759, %v650
    %v761 = vpop.permute.xlu0 %760
    %764 = vset.pattern.permute.xlu0 0
    %765 = vperm.xlu0 %764, %v651
    %v766 = vpop.permute.xlu0 %765
    %769 = vset.pattern.permute.xlu0 0
    %770 = vperm.xlu0 %769, %v652
    %v771 = vpop.permute.xlu0 %770
    %774 = vset.pattern.permute.xlu0 0
    %775 = vperm.xlu0 %774, %v653
    %v776 = vpop.permute.xlu0 %775
    %779 = vset.pattern.permute.xlu0 0
    %780 = vperm.xlu0 %779, %v654
    %v781 = vpop.permute.xlu0 %780
    %784 = vset.pattern.permute.xlu0 0
    %785 = vperm.xlu0 %784, %v655
    %v786 = vpop.permute.xlu0 %785
    %789 = vset.pattern.permute.xlu0 0
    %790 = vperm.xlu0 %789, %v656
    %v791 = vpop.permute.xlu0 %790
    %794 = vset.pattern.permute.xlu0 0
    %795 = vperm.xlu0 %794, %v657
    %v796 = vpop.permute.xlu0 %795
    %799 = vset.pattern.permute.xlu0 0
    %800 = vperm.xlu0 %799, %v658
    %v801 = vpop.permute.xlu0 %800
    %804 = vset.pattern.permute.xlu0 0
    %805 = vperm.xlu0 %804, %v659
    %v806 = vpop.permute.xlu0 %805
    %809 = vset.pattern.permute.xlu0 0
    %810 = vperm.xlu0 %809, %v660
    %v811 = vpop.permute.xlu0 %810
    %814 = vset.pattern.permute.xlu0 0
    %815 = vperm.xlu0 %814, %v661
    %v816 = vpop.permute.xlu0 %815
    %819 = vset.pattern.permute.xlu0 0
    %820 = vperm.xlu0 %819, %v662
    %v821 = vpop.permute.xlu0 %820
    %v855 = vunpack.c.l.b16 %v583
    %v856 = vunpack.c.h.b16 %v583
    %v857 = vunpack.c.l.b16 %v584
    %v858 = vunpack.c.h.b16 %v584
    %v859 = vunpack.c.l.b16 %v585
    %v860 = vunpack.c.h.b16 %v585
    %v861 = vunpack.c.l.b16 %v586
    %v862 = vunpack.c.h.b16 %v586
    %v863 = vunpack.c.l.b16 %v587
    %v864 = vunpack.c.h.b16 %v587
    %v865 = vunpack.c.l.b16 %v588
    %v866 = vunpack.c.h.b16 %v588
    %v867 = vunpack.c.l.b16 %v589
    %v868 = vunpack.c.h.b16 %v589
    %v869 = vunpack.c.l.b16 %v590
    %v870 = vunpack.c.h.b16 %v590
    %v871 = vunpack.c.l.b16 %v591
    %v872 = vunpack.c.h.b16 %v591
    %v873 = vunpack.c.l.b16 %v592
    %v874 = vunpack.c.h.b16 %v592
    %v875 = vunpack.c.l.b16 %v593
    %v876 = vunpack.c.h.b16 %v593
    %v877 = vunpack.c.l.b16 %v594
    %v878 = vunpack.c.h.b16 %v594
    %v879 = vunpack.c.l.b16 %v595
    %v880 = vunpack.c.h.b16 %v595
    %v881 = vunpack.c.l.b16 %v596
    %v882 = vunpack.c.h.b16 %v596
    %v883 = vunpack.c.l.b16 %v597
    %v884 = vunpack.c.h.b16 %v597
    %v885 = vunpack.c.l.b16 %v598
    %v886 = vunpack.c.h.b16 %v598
    %v887 = vunpack.c.l.b16 %v599
    %v888 = vunpack.c.h.b16 %v599
    %v889 = vunpack.c.l.b16 %v600
    %v890 = vunpack.c.h.b16 %v600
    %v891 = vunpack.c.l.b16 %v601
    %v892 = vunpack.c.h.b16 %v601
    %v893 = vunpack.c.l.b16 %v602
    %v894 = vunpack.c.h.b16 %v602
    %v895 = vunpack.c.l.b16 %v603
    %v896 = vunpack.c.h.b16 %v603
    %v897 = vunpack.c.l.b16 %v604
    %v898 = vunpack.c.h.b16 %v604
    %v899 = vunpack.c.l.b16 %v605
    %v900 = vunpack.c.h.b16 %v605
    %v901 = vunpack.c.l.b16 %v606
    %v902 = vunpack.c.h.b16 %v606
    %v903 = vunpack.c.l.b16 %v607
    %v904 = vunpack.c.h.b16 %v607
    %v905 = vunpack.c.l.b16 %v608
    %v906 = vunpack.c.h.b16 %v608
    %v907 = vunpack.c.l.b16 %v609
    %v908 = vunpack.c.h.b16 %v609
    %v909 = vunpack.c.l.b16 %v610
    %v910 = vunpack.c.h.b16 %v610
    %v911 = vunpack.c.l.b16 %v611
    %v912 = vunpack.c.h.b16 %v611
    %v913 = vunpack.c.l.b16 %v612
    %v914 = vunpack.c.h.b16 %v612
    %v915 = vunpack.c.l.b16 %v613
    %v916 = vunpack.c.h.b16 %v613
    %v917 = vunpack.c.l.b16 %v614
    %v918 = vunpack.c.h.b16 %v614
    %v919 = vpack.c.b16 %v857, %v855
    %v920 = vpack.c.b16 %v858, %v856
    %v921 = vpack.c.b16 %v861, %v859
    %v922 = vpack.c.b16 %v862, %v860
    %v923 = vpack.c.b16 %v865, %v863
    %v924 = vpack.c.b16 %v866, %v864
    %v925 = vpack.c.b16 %v869, %v867
    %v926 = vpack.c.b16 %v870, %v868
    %v927 = vpack.c.b16 %v873, %v871
    %v928 = vpack.c.b16 %v874, %v872
    %v929 = vpack.c.b16 %v877, %v875
    %v930 = vpack.c.b16 %v878, %v876
    %v931 = vpack.c.b16 %v881, %v879
    %v932 = vpack.c.b16 %v882, %v880
    %v933 = vpack.c.b16 %v885, %v883
    %v934 = vpack.c.b16 %v886, %v884
    %v935 = vpack.c.b16 %v889, %v887
    %v936 = vpack.c.b16 %v890, %v888
    %v937 = vpack.c.b16 %v893, %v891
    %v938 = vpack.c.b16 %v894, %v892
    %v939 = vpack.c.b16 %v897, %v895
    %v940 = vpack.c.b16 %v898, %v896
    %v941 = vpack.c.b16 %v901, %v899
    %v942 = vpack.c.b16 %v902, %v900
    %v943 = vpack.c.b16 %v905, %v903
    %v944 = vpack.c.b16 %v906, %v904
    %v945 = vpack.c.b16 %v909, %v907
    %v946 = vpack.c.b16 %v910, %v908
    %v947 = vpack.c.b16 %v913, %v911
    %v948 = vpack.c.b16 %v914, %v912
    %v949 = vpack.c.b16 %v917, %v915
    %v950 = vpack.c.b16 %v918, %v916
    %983 = vmatprep.subr.bf16.mxu0 0
    %984 = vmatpush1.bf16.msra.mxu0 %v622
    %985 = vmatprep.subr.bf16.mxu0 0
    %986 = vmatpush1.bf16.msra.mxu0 %v621
    %987 = vmatprep.subr.bf16.mxu0 0
    %988 = vmatpush1.bf16.msra.mxu0 %v620
    %989 = vmatprep.subr.bf16.mxu0 0
    %990 = vmatpush1.bf16.msra.mxu0 %v619
    %991 = vmatprep.subr.bf16.mxu0 0
    %992 = vmatpush1.bf16.msra.mxu0 %v618
    %993 = vmatprep.subr.bf16.mxu0 0
    %994 = vmatpush1.bf16.msra.mxu0 %v617
    %995 = vmatprep.subr.bf16.mxu0 0
    %996 = vmatpush1.bf16.msra.mxu0 %v616
    %997 = vmatprep.subr.bf16.mxu0 0
    %998 = vmatpush1.bf16.msra.mxu0 %v615
    %999 = vmatprep.subr.bf16.mxu0 0
    %1000 = vmatpush2.bf16.msra.mxu0 %v630
    %1001 = vmatprep.subr.bf16.mxu0 0
    %1002 = vmatpush2.bf16.msra.mxu0 %v629
    %1003 = vmatprep.subr.bf16.mxu0 0
    %1004 = vmatpush2.bf16.msra.mxu0 %v628
    %1005 = vmatprep.subr.bf16.mxu0 0
    %1006 = vmatpush2.bf16.msra.mxu0 %v627
    %1007 = vmatprep.subr.bf16.mxu0 0
    %1008 = vmatpush2.bf16.msra.mxu0 %v626
    %1009 = vmatprep.subr.bf16.mxu0 0
    %1010 = vmatpush2.bf16.msra.mxu0 %v625
    %1011 = vmatprep.subr.bf16.mxu0 0
    %1012 = vmatpush2.bf16.msra.mxu0 %v624
    %1013 = vmatprep.subr.bf16.mxu0 0
    %1014 = vmatpush2.bf16.msra.mxu0 %v623
    %1015 = vmatprep.mubr.bf16.mxu0 %v920
    %1016 = vmatmul.mubr.bf16.gmra.mxu0 %v919
    %v1017 = vpop.f32.mrf.mxu0
    %v1018 = vadd.f32 %v666, %v1017
    %v1019 = vpop.f32.mrf.mxu0
    %v1020 = vpop.f32.mrf.mxu0
    %v1021 = vadd.f32 %v671, %v1020
    %v1022 = vpop.f32.mrf.mxu0
    %1023 = vmatprep.mubr.bf16.mxu0 %v922
    %1024 = vmatmul.mubr.bf16.gmra.mxu0 %v921
    %v1025 = vpop.f32.mrf.mxu0
    %v1026 = vadd.f32 %v676, %v1025
    %v1027 = vpop.f32.mrf.mxu0
    %v1028 = vpop.f32.mrf.mxu0
    %v1029 = vadd.f32 %v681, %v1028
    %v1030 = vpop.f32.mrf.mxu0
    %1031 = vmatprep.mubr.bf16.mxu0 %v924
    %1032 = vmatmul.mubr.bf16.gmra.mxu0 %v923
    %v1033 = vpop.f32.mrf.mxu0
    %v1034 = vadd.f32 %v686, %v1033
    %v1035 = vpop.f32.mrf.mxu0
    %v1036 = vpop.f32.mrf.mxu0
    %v1037 = vadd.f32 %v691, %v1036
    %v1038 = vpop.f32.mrf.mxu0
    %1039 = vmatprep.mubr.bf16.mxu0 %v926
    %1040 = vmatmul.mubr.bf16.gmra.mxu0 %v925
    %v1041 = vpop.f32.mrf.mxu0
    %v1042 = vadd.f32 %v696, %v1041
    %v1043 = vpop.f32.mrf.mxu0
    %v1044 = vpop.f32.mrf.mxu0
    %v1045 = vadd.f32 %v701, %v1044
    %v1046 = vpop.f32.mrf.mxu0
    %1047 = vmatprep.mubr.bf16.mxu0 %v928
    %1048 = vmatmul.mubr.bf16.gmra.mxu0 %v927
    %v1049 = vpop.f32.mrf.mxu0
    %v1050 = vadd.f32 %v706, %v1049
    %v1051 = vpop.f32.mrf.mxu0
    %v1052 = vpop.f32.mrf.mxu0
    %v1053 = vadd.f32 %v711, %v1052
    %v1054 = vpop.f32.mrf.mxu0
    %1055 = vmatprep.mubr.bf16.mxu0 %v930
    %1056 = vmatmul.mubr.bf16.gmra.mxu0 %v929
    %v1057 = vpop.f32.mrf.mxu0
    %v1058 = vadd.f32 %v716, %v1057
    %v1059 = vpop.f32.mrf.mxu0
    %v1060 = vpop.f32.mrf.mxu0
    %v1061 = vadd.f32 %v721, %v1060
    %v1062 = vpop.f32.mrf.mxu0
    %1063 = vmatprep.mubr.bf16.mxu0 %v932
    %1064 = vmatmul.mubr.bf16.gmra.mxu0 %v931
    %v1065 = vpop.f32.mrf.mxu0
    %v1066 = vadd.f32 %v726, %v1065
    %v1067 = vpop.f32.mrf.mxu0
    %v1068 = vpop.f32.mrf.mxu0
    %v1069 = vadd.f32 %v731, %v1068
    %v1070 = vpop.f32.mrf.mxu0
    %1071 = vmatprep.mubr.bf16.mxu0 %v934
    %1072 = vmatmul.mubr.bf16.gmra.mxu0 %v933
    %v1073 = vpop.f32.mrf.mxu0
    %v1074 = vadd.f32 %v736, %v1073
    %v1075 = vpop.f32.mrf.mxu0
    %v1076 = vpop.f32.mrf.mxu0
    %v1077 = vadd.f32 %v741, %v1076
    %v1078 = vpop.f32.mrf.mxu0
    %1079 = vmatprep.mubr.bf16.mxu0 %v936
    %1080 = vmatmul.mubr.bf16.gmra.mxu0 %v935
    %v1081 = vpop.f32.mrf.mxu0
    %v1082 = vadd.f32 %v746, %v1081
    %v1083 = vpop.f32.mrf.mxu0
    %v1084 = vpop.f32.mrf.mxu0
    %v1085 = vadd.f32 %v751, %v1084
    %v1086 = vpop.f32.mrf.mxu0
    %1087 = vmatprep.mubr.bf16.mxu0 %v938
    %1088 = vmatmul.mubr.bf16.gmra.mxu0 %v937
    %v1089 = vpop.f32.mrf.mxu0
    %v1090 = vadd.f32 %v756, %v1089
    %v1091 = vpop.f32.mrf.mxu0
    %v1092 = vpop.f32.mrf.mxu0
    %v1093 = vadd.f32 %v761, %v1092
    %v1094 = vpop.f32.mrf.mxu0
    %1095 = vmatprep.mubr.bf16.mxu0 %v940
    %1096 = vmatmul.mubr.bf16.gmra.mxu0 %v939
    %v1097 = vpop.f32.mrf.mxu0
    %v1098 = vadd.f32 %v766, %v1097
    %v1099 = vpop.f32.mrf.mxu0
    %v1100 = vpop.f32.mrf.mxu0
    %v1101 = vadd.f32 %v771, %v1100
    %v1102 = vpop.f32.mrf.mxu0
    %1103 = vmatprep.mubr.bf16.mxu0 %v942
    %1104 = vmatmul.mubr.bf16.gmra.mxu0 %v941
    %v1105 = vpop.f32.mrf.mxu0
    %v1106 = vadd.f32 %v776, %v1105
    %v1107 = vpop.f32.mrf.mxu0
    %v1108 = vpop.f32.mrf.mxu0
    %v1109 = vadd.f32 %v781, %v1108
    %v1110 = vpop.f32.mrf.mxu0
    %1111 = vmatprep.mubr.bf16.mxu0 %v944
    %1112 = vmatmul.mubr.bf16.gmra.mxu0 %v943
    %v1113 = vpop.f32.mrf.mxu0
    %v1114 = vadd.f32 %v786, %v1113
    %v1115 = vpop.f32.mrf.mxu0
    %v1116 = vpop.f32.mrf.mxu0
    %v1117 = vadd.f32 %v791, %v1116
    %v1118 = vpop.f32.mrf.mxu0
    %1119 = vmatprep.mubr.bf16.mxu0 %v946
    %1120 = vmatmul.mubr.bf16.gmra.mxu0 %v945
    %v1121 = vpop.f32.mrf.mxu0
    %v1122 = vadd.f32 %v796, %v1121
    %v1123 = vpop.f32.mrf.mxu0
    %v1124 = vpop.f32.mrf.mxu0
    %v1125 = vadd.f32 %v801, %v1124
    %v1126 = vpop.f32.mrf.mxu0
    %1127 = vmatprep.mubr.bf16.mxu0 %v948
    %1128 = vmatmul.mubr.bf16.gmra.mxu0 %v947
    %v1129 = vpop.f32.mrf.mxu0
    %v1130 = vadd.f32 %v806, %v1129
    %v1131 = vpop.f32.mrf.mxu0
    %v1132 = vpop.f32.mrf.mxu0
    %v1133 = vadd.f32 %v811, %v1132
    %v1134 = vpop.f32.mrf.mxu0
    %1135 = vmatprep.mubr.bf16.mxu0 %v950
    %1136 = vmatmul.mubr.bf16.gmra.mxu0 %v949
    %v1137 = vpop.f32.mrf.mxu0
    %v1138 = vadd.f32 %v816, %v1137
    %v1139 = vpop.f32.mrf.mxu0
    %v1140 = vpop.f32.mrf.mxu0
    %v1141 = vadd.f32 %v821, %v1140
    %v1142 = vpop.f32.mrf.mxu0
    %1143 = vdwg.mxu0
    %v1144 = vmax.f32 %v1018, 0.0
    %v1145 = vmax.f32 %v1021, 0.0
    %v1146 = vmax.f32 %v1026, 0.0
    %v1147 = vmax.f32 %v1029, 0.0
    %v1148 = vmax.f32 %v1034, 0.0
    %v1149 = vmax.f32 %v1037, 0.0
    %v1150 = vmax.f32 %v1042, 0.0
    %v1151 = vmax.f32 %v1045, 0.0
    %v1152 = vmax.f32 %v1050, 0.0
    %v1153 = vmax.f32 %v1053, 0.0
    %v1154 = vmax.f32 %v1058, 0.0
    %v1155 = vmax.f32 %v1061, 0.0
    %v1156 = vmax.f32 %v1066, 0.0
    %v1157 = vmax.f32 %v1069, 0.0
    %v1158 = vmax.f32 %v1074, 0.0
    %v1159 = vmax.f32 %v1077, 0.0
    %v1160 = vmax.f32 %v1082, 0.0
    %v1161 = vmax.f32 %v1085, 0.0
    %v1162 = vmax.f32 %v1090, 0.0
    %v1163 = vmax.f32 %v1093, 0.0
    %v1164 = vmax.f32 %v1098, 0.0
    %v1165 = vmax.f32 %v1101, 0.0
    %v1166 = vmax.f32 %v1106, 0.0
    %v1167 = vmax.f32 %v1109, 0.0
    %v1168 = vmax.f32 %v1114, 0.0
    %v1169 = vmax.f32 %v1117, 0.0
    %v1170 = vmax.f32 %v1122, 0.0
    %v1171 = vmax.f32 %v1125, 0.0
    %v1172 = vmax.f32 %v1130, 0.0
    %v1173 = vmax.f32 %v1133, 0.0
    %v1174 = vmax.f32 %v1138, 0.0
    %v1175 = vmax.f32 %v1141, 0.0
    %v1176 = vld [vmem:[%s5] sm:$0xff]
    %v1177 = vld [vmem:[%s5 + $0x8] sm:$0xff]
    %v1178 = vld [vmem:[%s5 + $0x10] sm:$0xff]
    %v1179 = vld [vmem:[%s5 + $0x18] sm:$0xff]
    %v1180 = vld [vmem:[%s5 + $0x20] sm:$0xff]
    %v1181 = vld [vmem:[%s5 + $0x28] sm:$0xff]
    %v1182 = vld [vmem:[%s5 + $0x30] sm:$0xff]
    %v1183 = vld [vmem:[%s5 + $0x38] sm:$0xff]
    %v1184 = vld [vmem:[%s5 + $0x40] sm:$0xff]
    %v1185 = vld [vmem:[%s5 + $0x48] sm:$0xff]
    %v1186 = vld [vmem:[%s5 + $0x50] sm:$0xff]
    %v1187 = vld [vmem:[%s5 + $0x58] sm:$0xff]
    %v1188 = vld [vmem:[%s5 + $0x60] sm:$0xff]
    %v1189 = vld [vmem:[%s5 + $0x68] sm:$0xff]
    %v1190 = vld [vmem:[%s5 + $0x70] sm:$0xff]
    %v1191 = vld [vmem:[%s5 + $0x78] sm:$0xff]
    %v1192 = vld [vmem:[%s5 + $0x80] sm:$0xff]
    %v1193 = vld [vmem:[%s5 + $0x88] sm:$0xff]
    %v1194 = vld [vmem:[%s5 + $0x90] sm:$0xff]
    %v1195 = vld [vmem:[%s5 + $0x98] sm:$0xff]
    %v1196 = vld [vmem:[%s5 + $0xa0] sm:$0xff]
    %v1197 = vld [vmem:[%s5 + $0xa8] sm:$0xff]
    %v1198 = vld [vmem:[%s5 + $0xb0] sm:$0xff]
    %v1199 = vld [vmem:[%s5 + $0xb8] sm:$0xff]
    %v1200 = vld [vmem:[%s5 + $0xc0] sm:$0xff]
    %v1201 = vld [vmem:[%s5 + $0xc8] sm:$0xff]
    %v1202 = vld [vmem:[%s5 + $0xd0] sm:$0xff]
    %v1203 = vld [vmem:[%s5 + $0xd8] sm:$0xff]
    %v1204 = vld [vmem:[%s5 + $0xe0] sm:$0xff]
    %v1205 = vld [vmem:[%s5 + $0xe8] sm:$0xff]
    %v1206 = vld [vmem:[%s5 + $0xf0] sm:$0xff]
    %v1207 = vld [vmem:[%s5 + $0xf8] sm:$0xff]
    %1209 = vset.pattern.permute.xlu0 0
    %1210 = vperm.xlu0 %1209, %v1176
    %v1211 = vpop.permute.xlu0 %1210
    %1214 = vset.pattern.permute.xlu0 0
    %1215 = vperm.xlu0 %1214, %v1177
    %v1216 = vpop.permute.xlu0 %1215
    %1219 = vset.pattern.permute.xlu0 0
    %1220 = vperm.xlu0 %1219, %v1178
    %v1221 = vpop.permute.xlu0 %1220
    %1224 = vset.pattern.permute.xlu0 0
    %1225 = vperm.xlu0 %1224, %v1179
    %v1226 = vpop.permute.xlu0 %1225
    %1229 = vset.pattern.permute.xlu0 0
    %1230 = vperm.xlu0 %1229, %v1180
    %v1231 = vpop.permute.xlu0 %1230
    %1234 = vset.pattern.permute.xlu0 0
    %1235 = vperm.xlu0 %1234, %v1181
    %v1236 = vpop.permute.xlu0 %1235
    %1239 = vset.pattern.permute.xlu0 0
    %1240 = vperm.xlu0 %1239, %v1182
    %v1241 = vpop.permute.xlu0 %1240
    %1244 = vset.pattern.permute.xlu0 0
    %1245 = vperm.xlu0 %1244, %v1183
    %v1246 = vpop.permute.xlu0 %1245
    %1249 = vset.pattern.permute.xlu0 0
    %1250 = vperm.xlu0 %1249, %v1184
    %v1251 = vpop.permute.xlu0 %1250
    %1254 = vset.pattern.permute.xlu0 0
    %1255 = vperm.xlu0 %1254, %v1185
    %v1256 = vpop.permute.xlu0 %1255
    %1259 = vset.pattern.permute.xlu0 0
    %1260 = vperm.xlu0 %1259, %v1186
    %v1261 = vpop.permute.xlu0 %1260
    %1264 = vset.pattern.permute.xlu0 0
    %1265 = vperm.xlu0 %1264, %v1187
    %v1266 = vpop.permute.xlu0 %1265
    %1269 = vset.pattern.permute.xlu0 0
    %1270 = vperm.xlu0 %1269, %v1188
    %v1271 = vpop.permute.xlu0 %1270
    %1274 = vset.pattern.permute.xlu0 0
    %1275 = vperm.xlu0 %1274, %v1189
    %v1276 = vpop.permute.xlu0 %1275
    %1279 = vset.pattern.permute.xlu0 0
    %1280 = vperm.xlu0 %1279, %v1190
    %v1281 = vpop.permute.xlu0 %1280
    %1284 = vset.pattern.permute.xlu0 0
    %1285 = vperm.xlu0 %1284, %v1191
    %v1286 = vpop.permute.xlu0 %1285
    %1289 = vset.pattern.permute.xlu0 0
    %1290 = vperm.xlu0 %1289, %v1192
    %v1291 = vpop.permute.xlu0 %1290
    %1294 = vset.pattern.permute.xlu0 0
    %1295 = vperm.xlu0 %1294, %v1193
    %v1296 = vpop.permute.xlu0 %1295
    %1299 = vset.pattern.permute.xlu0 0
    %1300 = vperm.xlu0 %1299, %v1194
    %v1301 = vpop.permute.xlu0 %1300
    %1304 = vset.pattern.permute.xlu0 0
    %1305 = vperm.xlu0 %1304, %v1195
    %v1306 = vpop.permute.xlu0 %1305
    %1309 = vset.pattern.permute.xlu0 0
    %1310 = vperm.xlu0 %1309, %v1196
    %v1311 = vpop.permute.xlu0 %1310
    %1314 = vset.pattern.permute.xlu0 0
    %1315 = vperm.xlu0 %1314, %v1197
    %v1316 = vpop.permute.xlu0 %1315
    %1319 = vset.pattern.permute.xlu0 0
    %1320 = vperm.xlu0 %1319, %v1198
    %v1321 = vpop.permute.xlu0 %1320
    %1324 = vset.pattern.permute.xlu0 0
    %1325 = vperm.xlu0 %1324, %v1199
    %v1326 = vpop.permute.xlu0 %1325
    %1329 = vset.pattern.permute.xlu0 0
    %1330 = vperm.xlu0 %1329, %v1200
    %v1331 = vpop.permute.xlu0 %1330
    %1334 = vset.pattern.permute.xlu0 0
    %1335 = vperm.xlu0 %1334, %v1201
    %v1336 = vpop.permute.xlu0 %1335
    %1339 = vset.pattern.permute.xlu0 0
    %1340 = vperm.xlu0 %1339, %v1202
    %v1341 = vpop.permute.xlu0 %1340
    %1344 = vset.pattern.permute.xlu0 0
    %1345 = vperm.xlu0 %1344, %v1203
    %v1346 = vpop.permute.xlu0 %1345
    %1349 = vset.pattern.permute.xlu0 0
    %1350 = vperm.xlu0 %1349, %v1204
    %v1351 = vpop.permute.xlu0 %1350
    %1354 = vset.pattern.permute.xlu0 0
    %1355 = vperm.xlu0 %1354, %v1205
    %v1356 = vpop.permute.xlu0 %1355
    %1359 = vset.pattern.permute.xlu0 0
    %1360 = vperm.xlu0 %1359, %v1206
    %v1361 = vpop.permute.xlu0 %1360
    %1364 = vset.pattern.permute.xlu0 0
    %1365 = vperm.xlu0 %1364, %v1207
    %v1366 = vpop.permute.xlu0 %1365
    %v1368 = vmul.f32 %v1144, %v1211
    %v1369 = vmul.f32 %v1145, %v1216
    %v1370 = vmul.f32 %v1146, %v1221
    %v1371 = vmul.f32 %v1147, %v1226
    %v1372 = vmul.f32 %v1148, %v1231
    %v1373 = vmul.f32 %v1149, %v1236
    %v1374 = vmul.f32 %v1150, %v1241
    %v1375 = vmul.f32 %v1151, %v1246
    %v1376 = vmul.f32 %v1152, %v1251
    %v1377 = vmul.f32 %v1153, %v1256
    %v1378 = vmul.f32 %v1154, %v1261
    %v1379 = vmul.f32 %v1155, %v1266
    %v1380 = vmul.f32 %v1156, %v1271
    %v1381 = vmul.f32 %v1157, %v1276
    %v1382 = vmul.f32 %v1158, %v1281
    %v1383 = vmul.f32 %v1159, %v1286
    %v1384 = vmul.f32 %v1160, %v1291
    %v1385 = vmul.f32 %v1161, %v1296
    %v1386 = vmul.f32 %v1162, %v1301
    %v1387 = vmul.f32 %v1163, %v1306
    %v1388 = vmul.f32 %v1164, %v1311
    %v1389 = vmul.f32 %v1165, %v1316
    %v1390 = vmul.f32 %v1166, %v1321
    %v1391 = vmul.f32 %v1167, %v1326
    %v1392 = vmul.f32 %v1168, %v1331
    %v1393 = vmul.f32 %v1169, %v1336
    %v1394 = vmul.f32 %v1170, %v1341
    %v1395 = vmul.f32 %v1171, %v1346
    %v1396 = vmul.f32 %v1172, %v1351
    %v1397 = vmul.f32 %v1173, %v1356
    %v1398 = vmul.f32 %v1174, %v1361
    %v1399 = vmul.f32 %v1175, %v1366
    %vm1400 = vcmask 15360
    %v1401 = vsel %vm1400, %v1368, 0.0
    %v1402 = vsel %vm1400, %v1369, 0.0
    %v1403 = vadd.f32 %v1401, %v1402
    %v1404 = vsel %vm1400, %v1370, 0.0
    %v1405 = vadd.f32 %v1403, %v1404
    %v1406 = vsel %vm1400, %v1371, 0.0
    %v1407 = vadd.f32 %v1405, %v1406
    %v1408 = vsel %vm1400, %v1372, 0.0
    %v1409 = vadd.f32 %v1407, %v1408
    %v1410 = vsel %vm1400, %v1373, 0.0
    %v1411 = vadd.f32 %v1409, %v1410
    %v1412 = vsel %vm1400, %v1374, 0.0
    %v1413 = vadd.f32 %v1411, %v1412
    %v1414 = vsel %vm1400, %v1375, 0.0
    %v1415 = vadd.f32 %v1413, %v1414
    %v1416 = vsel %vm1400, %v1376, 0.0
    %v1417 = vadd.f32 %v1415, %v1416
    %v1418 = vsel %vm1400, %v1377, 0.0
    %v1419 = vadd.f32 %v1417, %v1418
    %v1420 = vsel %vm1400, %v1378, 0.0
    %v1421 = vadd.f32 %v1419, %v1420
    %v1422 = vsel %vm1400, %v1379, 0.0
    %v1423 = vadd.f32 %v1421, %v1422
    %v1424 = vsel %vm1400, %v1380, 0.0
    %v1425 = vadd.f32 %v1423, %v1424
    %v1426 = vsel %vm1400, %v1381, 0.0
    %v1427 = vadd.f32 %v1425, %v1426
    %v1428 = vsel %vm1400, %v1382, 0.0
    %v1429 = vadd.f32 %v1427, %v1428
    %v1430 = vsel %vm1400, %v1383, 0.0
    %v1431 = vadd.f32 %v1429, %v1430
    %v1432 = vsel %vm1400, %v1384, 0.0
    %v1433 = vadd.f32 %v1431, %v1432
    %v1434 = vsel %vm1400, %v1385, 0.0
    %v1435 = vadd.f32 %v1433, %v1434
    %v1436 = vsel %vm1400, %v1386, 0.0
    %v1437 = vadd.f32 %v1435, %v1436
    %v1438 = vsel %vm1400, %v1387, 0.0
    %v1439 = vadd.f32 %v1437, %v1438
    %v1440 = vsel %vm1400, %v1388, 0.0
    %v1441 = vadd.f32 %v1439, %v1440
    %v1442 = vsel %vm1400, %v1389, 0.0
    %v1443 = vadd.f32 %v1441, %v1442
    %v1444 = vsel %vm1400, %v1390, 0.0
    %v1445 = vadd.f32 %v1443, %v1444
    %v1446 = vsel %vm1400, %v1391, 0.0
    %v1447 = vadd.f32 %v1445, %v1446
    %v1448 = vsel %vm1400, %v1392, 0.0
    %v1449 = vadd.f32 %v1447, %v1448
    %v1450 = vsel %vm1400, %v1393, 0.0
    %v1451 = vadd.f32 %v1449, %v1450
    %v1452 = vsel %vm1400, %v1394, 0.0
    %v1453 = vadd.f32 %v1451, %v1452
    %v1454 = vsel %vm1400, %v1395, 0.0
    %v1455 = vadd.f32 %v1453, %v1454
    %v1456 = vsel %vm1400, %v1396, 0.0
    %v1457 = vadd.f32 %v1455, %v1456
    %v1458 = vsel %vm1400, %v1397, 0.0
    %v1459 = vadd.f32 %v1457, %v1458
    %v1460 = vsel %vm1400, %v1398, 0.0
    %v1461 = vadd.f32 %v1459, %v1460
    %v1462 = vsel %vm1400, %v1399, 0.0
    %v1463 = vadd.f32 %v1461, %v1462
    %v1464 = vrot.slane %v1463, 4
    %v1465 = vadd.f32 %v1463, %v1464
    %v1466 = vrot.slane %v1465, 2
    %v1467 = vadd.f32 %v1465, %v1466
    %v1468 = vrot.slane %v1467, 1
    %v1469 = vadd.f32 %v1467, %v1468
    %s1470 = sld [smem:[#allocation2]]
    %v1471 = vstv %s1470
    %v1472 = vadd.f32 %v1469, %v1471
    %vm1473 = vcmask 8192
    %1474 = vst.msk [vmem:[#allocation3] sm:$0x1] %vm1473, %v1472
    // Predicated region
    $region30: #{tpu_custom_call.1} parent=1 // pred_check
      _
    $region31: #{tpu_custom_call.1} parent=1 // pred_check_branch
      %1476 = sbr.rel (0) target = $region33
    $region32: #{tpu_custom_call.1} parent=1 // pred_region
      %s1478 = ssub.s32 16, 16
      %1479 = vsyncadd [#allocation4], %s1478
      %s1481 = sshll.u32 [#allocation3], 4
      %s1482 = int_to_ptr.vmem [resolvable:$true] %s1481
      %1484 = dma.vmem_to_hbm [thread:$0]  %s1482, 16, %s7, [#allocation4]
    $region33: #{tpu_custom_call.1} parent=1 // pred_fallthru
      _
    // Predicated region
    $region34: #{tpu_custom_call.1} parent=1 // pred_check
      _
    $region35: #{tpu_custom_call.1} parent=1 // pred_check_branch
      %1486 = sbr.rel (0) target = $region37
    $region36: #{tpu_custom_call.1} parent=1 // pred_region
      %1487 = dma.done [#allocation4], 16
    $region37: #{tpu_custom_call.1} parent=1 // pred_fallthru
      _
    %1488 = vsyncpa [#allocation4], 1

</llo_original>
